<compile_context>
chip_gen: v5e
topology: v5e:2x2
jax: 0.10.0
libtpu: 0.0.40
codegen_flags: <defaults>
</compile_context>

<pallas_src>
import functools
import math

import jax
import jax.numpy as jnp
from jax.experimental import pallas as pl
from jax.experimental.pallas import tpu as pltpu


def _round_up(x, m):
    return (x + m - 1) // m * m


def _l2_normalize(v):
    # torch.nn.functional.normalize(v, dim=-1): v / max(||v||, 1e-12)
    ss = jnp.sum(v * v, axis=-1, keepdims=True)
    return v * jax.lax.rsqrt(jnp.maximum(ss, 1e-24))


def _energy_kernel(x_ref, mem_ref, bias_ref, *refs,
                   na, nb, tile_m, tile_n,
                   beta_a, beta_b, normalize, mask_diagonale,
                   write_attn, static_lse, compute_dtype):
    if write_attn:
        attn_ref, ae_ref, be_ref = refs[:3]
        scratch = refs[3:]
    else:
        ae_ref, be_ref = refs[:2]
        scratch = refs[2:]
    if static_lse:
        x_sc, l_a, l_b = scratch
        m_a = m_b = None
    else:
        x_sc, m_a, l_a, m_b, l_b = scratch

    i = pl.program_id(0)          # query-tile index  ("parallel")
    j = pl.program_id(1)          # memory-tile index ("arbitrary", reduction)
    nj = pl.num_programs(1)
    neg_inf = jnp.float32(-jnp.inf)

    # Static upper bounds on beta*attn when inputs are L2-normalized
    # (|attn| <= 1 up to bf16 round-off; 1% slack covers it).
    M_a = abs(beta_a) * 1.01
    M_b = abs(beta_b) * 1.01

    @pl.when(j == 0)
    def _init():
        # Hoisted: normalize + cast x ONCE per query tile (x block is resident
        # across the whole reduction axis).
        xv = x_ref[...].astype(jnp.float32)
        if normalize:
            xv = xv * jax.lax.rsqrt(
                jnp.maximum(jnp.sum(xv * xv, axis=-1, keepdims=True), 1e-24))
        x_sc[...] = xv.astype(compute_dtype)
        l_a[...] = jnp.zeros_like(l_a)
        l_b[...] = jnp.zeros_like(l_b)
        if not static_lse:
            m_a[...] = jnp.full_like(m_a, -jnp.inf)
            m_b[...] = jnp.full_like(m_b, -jnp.inf)

    # MXU matmul: (tile_n, F) bf16 x (F, tile_m) bf16 -> (tile_n, tile_m) f32.
    attn = jnp.dot(x_sc[...], mem_ref[...], preferred_element_type=jnp.float32)

    if mask_diagonale:
        # Only this (rare) path pays for the iota/compare/select work.
        row = i * tile_n + jax.lax.broadcasted_iota(jnp.int32, (tile_n, tile_m), 0)
        col = j * tile_m + jax.lax.broadcasted_iota(jnp.int32, (tile_n, tile_m), 1)
        attn = jnp.where(row == col, neg_inf, attn)

    if write_attn:
        attn_ref[...] = attn.astype(attn_ref.dtype)

    # Precomputed per-column bias: row 0 selects the a-segment (0 for a-columns,
    # -inf for b-columns and padding), row 1 selects the b-segment.
    bias_a = bias_ref[0:1, :]
    bias_b = bias_ref[1:2, :]
    s_a = beta_a * attn + bias_a
    s_b = beta_b * attn + bias_b

    if static_lse:
        l_a[...] += jnp.sum(jnp.exp(s_a - M_a), axis=-1, keepdims=True)
        l_b[...] += jnp.sum(jnp.exp(s_b - M_b), axis=-1, keepdims=True)
    else:
        def _online(m_ref, l_ref, s):
            m_prev = m_ref[...]
            m_new = jnp.maximum(m_prev, jnp.max(s, axis=-1, keepdims=True))
            m_safe = jnp.where(m_new == neg_inf, 0.0, m_new)  # fully-masked rows
            l_ref[...] = (jnp.exp(m_prev - m_safe) * l_ref[...]
                          + jnp.sum(jnp.exp(s - m_safe), axis=-1, keepdims=True))
            m_ref[...] = m_new
        _online(m_a, l_a, s_a)
        _online(m_b, l_b, s_b)

    @pl.when(j == nj - 1)
    def _finalize():
        if static_lse:
            lse_a = M_a + jnp.log(l_a[...])
            lse_b = M_b + jnp.log(l_b[...])
        else:
            lse_a = m_a[...] + jnp.log(l_a[...])
            lse_b = m_b[...] + jnp.log(l_b[...])
        ae_ref[...] = -(lse_a - math.log(na)) * (1.0 / beta_a)
        be_ref[...] = -(lse_b - math.log(nb)) * (1.0 / beta_b)
        # TODO(synk): energies are stored as (tile_n, 1) blocks (lane-sparse,
        # masked stores); a lane-dense (1, N) layout needs an in-kernel
        # transpose and is negligible next to the attn writeback.


class Energy:
    """JAX/Pallas equivalent of hopfield_boosting.energy.Energy."""

    def __init__(self, a, b, beta_a, beta_b, normalize=True,
                 tile_m=None, tile_n=256, compute_dtype=jnp.bfloat16,
                 attn_dtype=jnp.float32):
        a = jnp.asarray(a, jnp.float32)
        b = jnp.asarray(b, jnp.float32)
        assert a.ndim == 2 and b.ndim == 2 and a.shape[-1] == b.shape[-1]
        assert a.shape[0] > 0 and b.shape[0] > 0
        assert float(beta_a) != 0.0 and float(beta_b) != 0.0
        if normalize:
            a = _l2_normalize(a)
            b = _l2_normalize(b)
        self.a = a                       # normalized f32 buffers (like register_buffer)
        self.b = b
        self.normalize = bool(normalize)
        self.beta_a = float(beta_a)
        self.beta_b = float(beta_b)
        self.compute_dtype = compute_dtype
        self.attn_dtype = attn_dtype     # bf16 here halves attn writeback HBM bytes

        self.na, self.f = a.shape
        self.nb = b.shape[0]
        self.m = self.na + self.nb

        # Memory-axis tile: multiple of 128 lanes -> lane-dense attn tiles and
        # 128-aligned MXU work on all generations (v5e 4x128^2 included).
        if tile_m is None:
            tile_m = min(1024, _round_up(self.m, 128))
        self.tile_m = int(tile_m)
        self.max_tile_n = int(tile_n)
        self.m_pad = _round_up(self.m, self.tile_m)

        # Contiguous [a; b] layout, padded only at the end, pre-transposed to
        # (F, m_pad) so the MXU sees a contraction-major (K, N) RHS, stored
        # once in bf16 (halves the mem HBM reads).
        mem = jnp.concatenate([a, b], axis=0)
        mem = jnp.pad(mem, ((0, self.m_pad - self.m), (0, 0)))
        self.mem_t = mem.T.astype(compute_dtype)          # (F, m_pad)

        # Precomputed column bias: row 0 keeps a-columns, row 1 keeps b-columns,
        # everything else (other segment + padding) is -inf.
        cols = jnp.arange(self.m_pad)
        bias_a = jnp.where(cols < self.na, 0.0, -jnp.inf)
        bias_b = jnp.where((cols >= self.na) & (cols < self.m), 0.0, -jnp.inf)
        self.bias = jnp.stack([bias_a, bias_b]).astype(jnp.float32)   # (2, m_pad)

        # |attn| <= 1 when everything is L2-normalized -> static-max LSE.
        self.static_lse = self.normalize

    def __call__(self, x, mask_diagonale=False, return_attn=True):
        x = jnp.asarray(x, jnp.float32)
        assert x.ndim >= 2 and x.shape[-1] == self.f
        batch_shape = x.shape[:-1]
        if mask_diagonale:
            assert x.ndim == 2, "mask_diagonale supported for 2-D x only"
            assert x.shape[0] == self.m, "attn must be square"
        x2 = x.reshape(-1, self.f)
        n = x2.shape[0]

        tile_n = min(self.max_tile_n, _round_up(n, 8))
        # Give the "parallel" query axis >= 2 tiles when possible so v7x's two
        # TensorCores both get work.
        if n > 8 and _round_up(n, tile_n) == tile_n:
            tile_n = _round_up((n + 1) // 2, 8)
        n_pad = _round_up(n, tile_n)
        if n_pad != n:
            x2 = jnp.pad(x2, ((0, n_pad - n), (0, 0)))
        grid = (n_pad // tile_n, self.m_pad // self.tile_m)

        kernel = functools.partial(
            _energy_kernel,
            na=self.na, nb=self.nb,
            tile_m=self.tile_m, tile_n=tile_n,
            beta_a=self.beta_a, beta_b=self.beta_b,
            normalize=self.normalize, mask_diagonale=bool(mask_diagonale),
            write_attn=bool(return_attn), static_lse=self.static_lse,
            compute_dtype=self.compute_dtype)

        in_specs = [
            pl.BlockSpec((tile_n, self.f), lambda i, j: (i, 0)),        # x tile
            pl.BlockSpec((self.f, self.tile_m), lambda i, j: (0, j)),   # mem tile (K, N)
            pl.BlockSpec((2, self.tile_m), lambda i, j: (0, j)),        # column bias
        ]
        out_specs = []
        out_shapes = []
        if return_attn:
            out_specs.append(
                pl.BlockSpec((tile_n, self.tile_m), lambda i, j: (i, j)))
            out_shapes.append(
                jax.ShapeDtypeStruct((n_pad, self.m_pad), self.attn_dtype))
        out_specs += [pl.BlockSpec((tile_n, 1), lambda i, j: (i, 0)),
                      pl.BlockSpec((tile_n, 1), lambda i, j: (i, 0))]
        out_shapes += [jax.ShapeDtypeStruct((n_pad, 1), jnp.float32),
                       jax.ShapeDtypeStruct((n_pad, 1), jnp.float32)]

        # Scratch: normalized bf16 x tile + LSE accumulators.
        scratch = [pltpu.VMEM((tile_n, self.f), self.compute_dtype)]
        if self.static_lse:
            scratch += [pltpu.VMEM((tile_n, 1), jnp.float32)] * 2          # l_a, l_b
        else:
            scratch += [pltpu.VMEM((tile_n, 1), jnp.float32)] * 4          # m_a,l_a,m_b,l_b

        outs = pl.pallas_call(
            kernel,
            out_shape=tuple(out_shapes),
            grid_spec=pltpu.PrefetchScalarGridSpec(
                num_scalar_prefetch=0,
                grid=grid,
                in_specs=in_specs,
                out_specs=out_specs,
                scratch_shapes=scratch),
            compiler_params=pltpu.CompilerParams(
                dimension_semantics=("parallel", "arbitrary"),
                vmem_limit_bytes=48 * 1024 * 1024),
        )(x2, self.mem_t, self.bias)

        if return_attn:
            attn_p, ae_p, be_p = outs
            # Contiguous layout: just slice the padding off (no concatenate).
            attn = attn_p[:n, :self.m] if (n_pad != n or self.m_pad != self.m) else attn_p
            attn = attn.reshape(batch_shape + (self.m,))
        else:
            ae_p, be_p = outs
            attn = None

        a_energy = ae_p[:n, 0].reshape(batch_shape)
        b_energy = be_p[:n, 0].reshape(batch_shape)
        return a_energy, b_energy, attn


def _reference(x, a, b, beta_a, beta_b, normalize=True, mask_diagonale=False,
               compute_dtype=jnp.bfloat16):
    """Pure-JAX reference with the same numerics (f32 normalize, bf16 matmul)."""
    if normalize:
        a, b, x = _l2_normalize(a), _l2_normalize(b), _l2_normalize(x)
    mem = jnp.concatenate([a, b], axis=0)
    attn = jax.lax.dot_general(
        x.astype(compute_dtype), mem.astype(compute_dtype),
        dimension_numbers=(((1,), (1,)), ((), ())),
        preferred_element_type=jnp.float32)
    if mask_diagonale:
        m = attn.shape[-1]
        idx = jnp.arange(m)
        attn = attn.at[idx, idx].set(-jnp.inf)
    na = a.shape[0]

    def lme(beta, s):
        return (jax.nn.logsumexp(beta * s, axis=-1) - math.log(s.shape[-1])) / beta

    return -lme(beta_a, attn[:, :na]), -lme(beta_b, attn[:, na:]), attn


if __name__ == "__main__":
    key = jax.random.PRNGKey(0)
    k1, k2, k3, k4 = jax.random.split(key, 4)

    N, F = 8, 32       # queries
    Na, Nb = 16, 16    # stored patterns
    beta_a, beta_b = 1.0, 4.0

    a = jax.random.normal(k1, (Na, F), jnp.float32)
    b = jax.random.normal(k2, (Nb, F), jnp.float32)
    x = jax.random.normal(k3, (N, F), jnp.float32)

    energy = Energy(a, b, beta_a, beta_b, normalize=True)

    # 1) plain forward (returns attn, like the PyTorch module)
    a_e, b_e, attn = energy(x)
    jax.block_until_ready((a_e, b_e, attn))
    ra, rb, rattn = _reference(x, a, b, beta_a, beta_b)
    assert attn.shape == (N, Na + Nb)
    assert jnp.allclose(attn, rattn, atol=2e-3), "attn mismatch"
    assert jnp.allclose(a_e, ra, atol=2e-3), "a_energy mismatch"
    assert jnp.allclose(b_e, rb, atol=2e-3), "b_energy mismatch"

    # 2) energies-only fast path (skips the attn HBM writeback entirely)
    a_e2, b_e2, attn_none = energy(x, return_attn=False)
    jax.block_until_ready((a_e2, b_e2))
    assert attn_none is None
    assert jnp.allclose(a_e2, a_e, atol=1e-6)
    assert jnp.allclose(b_e2, b_e, atol=1e-6)

    # 3) mask_diagonale path (requires square attn: N == Na + Nb)
    xs = jax.random.normal(k4, (Na + Nb, F), jnp.float32)
    a_em, b_em, attn_m = energy(xs, mask_diagonale=True)
    jax.block_until_ready((a_em, b_em, attn_m))
    ram, rbm, rattn_m = _reference(xs, a, b, beta_a, beta_b, mask_diagonale=True)
    M = Na + Nb
    diag = jnp.eye(M, dtype=bool)
    assert bool(jnp.all(jnp.isneginf(attn_m[diag]))), "diag not masked"
    assert jnp.allclose(jnp.where(diag, 0.0, attn_m),
                        jnp.where(diag, 0.0, rattn_m), atol=2e-3), "masked attn"
    assert jnp.allclose(a_em, ram, atol=2e-3), "masked a_energy mismatch"
    assert jnp.allclose(b_em, rbm, atol=2e-3), "masked b_energy mismatch"

    # 4) online-LSE path (normalize=False) still works
    energy_nn = Energy(a, b, beta_a, beta_b, normalize=False)
    a_en, b_en, attn_n = energy_nn(x)
    jax.block_until_ready((a_en, b_en, attn_n))
    ran, rbn, rattn_n = _reference(x, a, b, beta_a, beta_b, normalize=False)
    assert jnp.allclose(attn_n, rattn_n, atol=5e-2), "unnorm attn mismatch"
    assert jnp.allclose(a_en, ran, atol=5e-2), "unnorm a_energy mismatch"
    assert jnp.allclose(b_en, rbn, atol=5e-2), "unnorm b_energy mismatch"

    print("KERNEL_OK")
</pallas_src>

<mosaic_0001>
module attributes {stable_mosaic.version = 11 : i64} {
  func.func @_energy_kernel(%arg0: i32, %arg1: i32, %arg2: memref<8x32xf32, #tpu.memory_space<vmem>>, %arg3: memref<32x128xbf16, #tpu.memory_space<vmem>>, %arg4: memref<2x128xf32, #tpu.memory_space<vmem>>, %arg5: memref<8x128xf32, #tpu.memory_space<vmem>>, %arg6: memref<8x1xf32, #tpu.memory_space<vmem>>, %arg7: memref<8x1xf32, #tpu.memory_space<vmem>>, %arg8: memref<8x32xbf16, #tpu.memory_space<vmem>>, %arg9: memref<8x1xf32, #tpu.memory_space<vmem>>, %arg10: memref<8x1xf32, #tpu.memory_space<vmem>>) attributes {dimension_semantics = [#tpu.dimension_semantics<parallel>, #tpu.dimension_semantics<arbitrary>], iteration_bounds = array<i64: 1, 1>, scalar_prefetch = 0 : i64, scratch_operands = 3 : i64, tpu.core_type = #tpu.core_type<tc>, window_params = [{transform_indices = @transform_0, window_bounds = array<i64: 8, 32>}, {transform_indices = @transform_1, window_bounds = array<i64: 32, 128>}, {transform_indices = @transform_2, window_bounds = array<i64: 2, 128>}, {transform_indices = @transform_3, window_bounds = array<i64: 8, 128>}, {transform_indices = @transform_4, window_bounds = array<i64: 8, 1>}, {transform_indices = @transform_5, window_bounds = array<i64: 8, 1>}]} {
    %c0_i32 = arith.constant 0 : i32
    %0 = arith.cmpi eq, %arg1, %c0_i32 : i32
    %1 = arith.extui %0 : i1 to i32
    %c0_i32_0 = arith.constant 0 : i32
    %2 = arith.cmpi ne, %1, %c0_i32_0 : i32
    scf.if %2 {
      %c0_25 = arith.constant 0 : index
      %c0_26 = arith.constant 0 : index
      %36 = vector.load %arg2[%c0_25, %c0_26] : memref<8x32xf32, #tpu.memory_space<vmem>>, vector<8x32xf32>
      %37 = arith.mulf %36, %36 : vector<8x32xf32>
      %cst_27 = arith.constant dense<0.000000e+00> : vector<8xf32>
      %38 = vector.multi_reduction <add>, %37, %cst_27 [1] : vector<8x32xf32> to vector<8xf32>
      %39 = vector.shape_cast %38 : vector<8xf32> to vector<8x1xf32>
      %cst_28 = arith.constant 1.000000e-24 : f32
      %40 = vector.broadcast %cst_28 : f32 to vector<8x1xf32>
      %41 = arith.maximumf %39, %40 : vector<8x1xf32>
      %42 = math.rsqrt %41 : vector<8x1xf32>
      %43 = vector.broadcast %42 : vector<8x1xf32> to vector<8x32xf32>
      %44 = arith.mulf %36, %43 : vector<8x32xf32>
      %45 = arith.truncf %44 : vector<8x32xf32> to vector<8x32xbf16>
      %c0_29 = arith.constant 0 : index
      %c0_30 = arith.constant 0 : index
      %46 = vector.load %arg8[%c0_29, %c0_30] : memref<8x32xbf16, #tpu.memory_space<vmem>>, vector<8x32xbf16>
      tpu.vector_store %arg8[%c0_29, %c0_30], %45 {strides = array<i32>} : memref<8x32xbf16, #tpu.memory_space<vmem>>, vector<8x32xbf16>,
      %cst_31 = arith.constant 0.000000e+00 : f32
      %47 = vector.broadcast %cst_31 : f32 to vector<8x1xf32>
      %c0_32 = arith.constant 0 : index
      %c0_33 = arith.constant 0 : index
      %48 = vector.load %arg9[%c0_32, %c0_33] : memref<8x1xf32, #tpu.memory_space<vmem>>, vector<8x1xf32>
      tpu.vector_store %arg9[%c0_32, %c0_33], %47 {strides = array<i32>} : memref<8x1xf32, #tpu.memory_space<vmem>>, vector<8x1xf32>,
      %cst_34 = arith.constant 0.000000e+00 : f32
      %49 = vector.broadcast %cst_34 : f32 to vector<8x1xf32>
      %c0_35 = arith.constant 0 : index
      %c0_36 = arith.constant 0 : index
      %50 = vector.load %arg10[%c0_35, %c0_36] : memref<8x1xf32, #tpu.memory_space<vmem>>, vector<8x1xf32>
      tpu.vector_store %arg10[%c0_35, %c0_36], %49 {strides = array<i32>} : memref<8x1xf32, #tpu.memory_space<vmem>>, vector<8x1xf32>,
    } else {
    }
    %c0 = arith.constant 0 : index
    %c0_1 = arith.constant 0 : index
    %3 = vector.load %arg8[%c0, %c0_1] : memref<8x32xbf16, #tpu.memory_space<vmem>>, vector<8x32xbf16>
    %c0_2 = arith.constant 0 : index
    %c0_3 = arith.constant 0 : index
    %4 = vector.load %arg3[%c0_2, %c0_3] : memref<32x128xbf16, #tpu.memory_space<vmem>>, vector<32x128xbf16>
    %cst = arith.constant dense<0.000000e+00> : vector<8x128xf32>
    %5 = tpu.matmul %3, %4, %cst {dimension_numbers = #tpu.dot_dimension_numbers<[1], [0], [0], [1], [0, 0, 1, 1], [], []>} : vector<8x32xbf16>, vector<32x128xbf16>, vector<8x128xf32> -> vector<8x128xf32>
    %c0_4 = arith.constant 0 : index
    %c0_5 = arith.constant 0 : index
    %6 = vector.load %arg5[%c0_4, %c0_5] : memref<8x128xf32, #tpu.memory_space<vmem>>, vector<8x128xf32>
    tpu.vector_store %arg5[%c0_4, %c0_5], %5 {strides = array<i32>} : memref<8x128xf32, #tpu.memory_space<vmem>>, vector<8x128xf32>,
    %c0_6 = arith.constant 0 : index
    %c0_7 = arith.constant 0 : index
    %7 = vector.load %arg4[%c0_6, %c0_7] : memref<2x128xf32, #tpu.memory_space<vmem>>, vector<1x128xf32>
    %c1 = arith.constant 1 : index
    %c0_8 = arith.constant 0 : index
    %8 = vector.load %arg4[%c1, %c0_8] : memref<2x128xf32, #tpu.memory_space<vmem>>, vector<1x128xf32>
    %cst_9 = arith.constant 1.000000e+00 : f32
    %9 = vector.broadcast %cst_9 : f32 to vector<8x128xf32>
    %10 = arith.mulf %9, %5 : vector<8x128xf32>
    %11 = vector.broadcast %7 : vector<1x128xf32> to vector<8x128xf32>
    %12 = arith.addf %10, %11 : vector<8x128xf32>
    %cst_10 = arith.constant 4.000000e+00 : f32
    %13 = vector.broadcast %cst_10 : f32 to vector<8x128xf32>
    %14 = arith.mulf %13, %5 : vector<8x128xf32>
    %15 = vector.broadcast %8 : vector<1x128xf32> to vector<8x128xf32>
    %16 = arith.addf %14, %15 : vector<8x128xf32>
    %c0_11 = arith.constant 0 : index
    %c0_12 = arith.constant 0 : index
    %17 = vector.load %arg9[%c0_11, %c0_12] : memref<8x1xf32, #tpu.memory_space<vmem>>, vector<8x1xf32>
    %cst_13 = arith.constant 1.010000e+00 : f32
    %18 = vector.broadcast %cst_13 : f32 to vector<8x128xf32>
    %19 = arith.subf %12, %18 : vector<8x128xf32>
    %20 = math.exp %19 : vector<8x128xf32>
    %cst_14 = arith.constant dense<0.000000e+00> : vector<8xf32>
    %21 = vector.multi_reduction <add>, %20, %cst_14 [1] : vector<8x128xf32> to vector<8xf32>
    %22 = vector.shape_cast %21 : vector<8xf32> to vector<8x1xf32>
    %23 = arith.addf %17, %22 : vector<8x1xf32>
    %c0_15 = arith.constant 0 : index
    %c0_16 = arith.constant 0 : index
    %24 = vector.load %arg9[%c0_15, %c0_16] : memref<8x1xf32, #tpu.memory_space<vmem>>, vector<8x1xf32>
    tpu.vector_store %arg9[%c0_15, %c0_16], %23 {strides = array<i32>} : memref<8x1xf32, #tpu.memory_space<vmem>>, vector<8x1xf32>,
    %c0_17 = arith.constant 0 : index
    %c0_18 = arith.constant 0 : index
    %25 = vector.load %arg10[%c0_17, %c0_18] : memref<8x1xf32, #tpu.memory_space<vmem>>, vector<8x1xf32>
    %cst_19 = arith.constant 4.040000e+00 : f32
    %26 = vector.broadcast %cst_19 : f32 to vector<8x128xf32>
    %27 = arith.subf %16, %26 : vector<8x128xf32>
    %28 = math.exp %27 : vector<8x128xf32>
    %cst_20 = arith.constant dense<0.000000e+00> : vector<8xf32>
    %29 = vector.multi_reduction <add>, %28, %cst_20 [1] : vector<8x128xf32> to vector<8xf32>
    %30 = vector.shape_cast %29 : vector<8xf32> to vector<8x1xf32>
    %31 = arith.addf %25, %30 : vector<8x1xf32>
    %c0_21 = arith.constant 0 : index
    %c0_22 = arith.constant 0 : index
    %32 = vector.load %arg10[%c0_21, %c0_22] : memref<8x1xf32, #tpu.memory_space<vmem>>, vector<8x1xf32>
    tpu.vector_store %arg10[%c0_21, %c0_22], %31 {strides = array<i32>} : memref<8x1xf32, #tpu.memory_space<vmem>>, vector<8x1xf32>,
    %c0_i32_23 = arith.constant 0 : i32
    %33 = arith.cmpi eq, %arg1, %c0_i32_23 : i32
    %34 = arith.extui %33 : i1 to i32
    %c0_i32_24 = arith.constant 0 : i32
    %35 = arith.cmpi ne, %34, %c0_i32_24 : i32
    scf.if %35 {
      %c0_25 = arith.constant 0 : index
      %c0_26 = arith.constant 0 : index
      %36 = vector.load %arg9[%c0_25, %c0_26] : memref<8x1xf32, #tpu.memory_space<vmem>>, vector<8x1xf32>
      %37 = math.log %36 : vector<8x1xf32>
      %cst_27 = arith.constant 1.010000e+00 : f32
      %38 = vector.broadcast %cst_27 : f32 to vector<8x1xf32>
      %39 = arith.addf %38, %37 : vector<8x1xf32>
      %c0_28 = arith.constant 0 : index
      %c0_29 = arith.constant 0 : index
      %40 = vector.load %arg10[%c0_28, %c0_29] : memref<8x1xf32, #tpu.memory_space<vmem>>, vector<8x1xf32>
      %41 = math.log %40 : vector<8x1xf32>
      %cst_30 = arith.constant 4.040000e+00 : f32
      %42 = vector.broadcast %cst_30 : f32 to vector<8x1xf32>
      %43 = arith.addf %42, %41 : vector<8x1xf32>
      %cst_31 = arith.constant 2.77258873 : f32
      %44 = vector.broadcast %cst_31 : f32 to vector<8x1xf32>
      %45 = arith.subf %39, %44 : vector<8x1xf32>
      %cst_32 = arith.constant 0.000000e+00 : f32
      %46 = vector.broadcast %cst_32 : f32 to vector<8x1xf32>
      %47 = arith.subf %46, %45 : vector<8x1xf32>
      %cst_33 = arith.constant 1.000000e+00 : f32
      %48 = vector.broadcast %cst_33 : f32 to vector<8x1xf32>
      %49 = arith.mulf %47, %48 : vector<8x1xf32>
      %c0_34 = arith.constant 0 : index
      %c0_35 = arith.constant 0 : index
      %50 = vector.load %arg6[%c0_34, %c0_35] : memref<8x1xf32, #tpu.memory_space<vmem>>, vector<8x1xf32>
      tpu.vector_store %arg6[%c0_34, %c0_35], %49 {strides = array<i32>} : memref<8x1xf32, #tpu.memory_space<vmem>>, vector<8x1xf32>,
      %cst_36 = arith.constant 2.77258873 : f32
      %51 = vector.broadcast %cst_36 : f32 to vector<8x1xf32>
      %52 = arith.subf %43, %51 : vector<8x1xf32>
      %cst_37 = arith.constant 0.000000e+00 : f32
      %53 = vector.broadcast %cst_37 : f32 to vector<8x1xf32>
      %54 = arith.subf %53, %52 : vector<8x1xf32>
      %cst_38 = arith.constant 2.500000e-01 : f32
      %55 = vector.broadcast %cst_38 : f32 to vector<8x1xf32>
      %56 = arith.mulf %54, %55 : vector<8x1xf32>
      %c0_39 = arith.constant 0 : index
      %c0_40 = arith.constant 0 : index
      %57 = vector.load %arg7[%c0_39, %c0_40] : memref<8x1xf32, #tpu.memory_space<vmem>>, vector<8x1xf32>
      tpu.vector_store %arg7[%c0_39, %c0_40], %56 {strides = array<i32>} : memref<8x1xf32, #tpu.memory_space<vmem>>, vector<8x1xf32>,
    } else {
    }
    return
  }
  func.func @transform_0(%arg0: i32, %arg1: i32) -> (i32, i32) {
    %c0_i32 = arith.constant 0 : i32
    %c0_i32_0 = arith.constant 0 : i32
    return %arg0, %c0_i32 : i32, i32
  }
  func.func @transform_1(%arg0: i32, %arg1: i32) -> (i32, i32) {
    %c0_i32 = arith.constant 0 : i32
    %c0_i32_0 = arith.constant 0 : i32
    return %c0_i32, %arg1 : i32, i32
  }
  func.func @transform_2(%arg0: i32, %arg1: i32) -> (i32, i32) {
    %c0_i32 = arith.constant 0 : i32
    %c0_i32_0 = arith.constant 0 : i32
    return %c0_i32, %arg1 : i32, i32
  }
  func.func @transform_3(%arg0: i32, %arg1: i32) -> (i32, i32) {
    %c0_i32 = arith.constant 0 : i32
    return %arg0, %arg1 : i32, i32
  }
  func.func @transform_4(%arg0: i32, %arg1: i32) -> (i32, i32) {
    %c0_i32 = arith.constant 0 : i32
    %c0_i32_0 = arith.constant 0 : i32
    return %arg0, %c0_i32 : i32, i32
  }
  func.func @transform_5(%arg0: i32, %arg1: i32) -> (i32, i32) {
    %c0_i32 = arith.constant 0 : i32
    %c0_i32_0 = arith.constant 0 : i32
    return %arg0, %c0_i32 : i32, i32
  }
}

</mosaic_0001>

<llo_original>
// kernel: tpu_custom_call.1
$region0: #{tpu_custom_call.1}
  #allocation0 [shape = 'u32[]', space=smem, size = 0x4, offset = 0x4, fixed_abs, tag = 'smem constant byte address 0x4 - core index']
  #allocation1 [shape = 'u32[72,128]{1,0:T(1,128)}', space=vmem, size = 0x9000, scoped, tag = 'internal scratch']
  #allocation2 [shape = 'bf16[8,32]{1,0:T(8,128)(2,1)}', space=vmem, size = 0x800, scoped, tag = 'scratch operand']
  #allocation3 [shape = 'f32[8,1]{1,0:T(8,128)}', space=vmem, size = 0x1000, scoped, tag = 'scratch operand']
  #allocation4 [shape = 'f32[8,1]{1,0:T(8,128)}', space=vmem, size = 0x1000, scoped, tag = 'scratch operand']
  %s0 = inlined_call_operand.hbm [shape: f32[8,32], index: 0, kind: input, shape index: {}]
  %s1 = inlined_call_operand.hbm [shape: bf16[32,128], index: 1, kind: input, shape index: {}]
  %s2 = inlined_call_operand.hbm [shape: f32[2,128], index: 2, kind: input, shape index: {}]
  %s3 = inlined_call_operand.hbm [shape: f32[8,128], index: 3, kind: output, shape index: {0}]
  %s4 = inlined_call_operand.vmem [shape: f32[8,1], index: 4, kind: output, shape index: {1}]
  %s5 = inlined_call_operand.vmem [shape: f32[8,1], index: 5, kind: output, shape index: {2}]
  %6 = xla_tuple %s3, %s4, %s5
  %s7 = sld [smem:[#allocation0]]
  $region58: #{tpu_custom_call.1} parent=0
    _
  %s9 = ssub.s32 1, %s7
  %s10 = scalar_select 0, %s9, %s7
  $region1: #{tpu_custom_call.1} parent=0
    #allocation5 [shape = 'u8[4096]{0}', space=vmem, size = 0x1000, scoped, tag = 'input window, operand 0, single buffered']
    #allocation6 [shape = 's32[1]{0}', space=sflag, size = 0x4, scoped, tag = 'scoped memory for tpu_custom_call.1']
    #allocation7 [shape = 's32[1]{0}', space=sflag, size = 0x4, scoped, tag = 'scoped memory for tpu_custom_call.1']
    #allocation8 [shape = 'u8[8192]{0}', space=vmem, size = 0x2000, scoped, tag = 'input window, operand 1, single buffered']
    #allocation9 [shape = 's32[1]{0}', space=sflag, size = 0x4, scoped, tag = 'scoped memory for tpu_custom_call.1']
    #allocation10 [shape = 'u8[1024]{0}', space=vmem, size = 0x400, scoped, tag = 'input window, operand 2, single buffered']
    #allocation11 [shape = 'u8[4096]{0}', space=vmem, size = 0x1000, scoped, tag = 'output window, operand 0, single buffered']
    %11 = vsyncpa [#allocation6], 0
    %12 = vsyncpa [#allocation9], 0
    %13 = vsyncpa [#allocation7], 0
    // Predicated region
    $region2: #{tpu_custom_call.1} parent=1 // pred_check
      _
    $region3: #{tpu_custom_call.1} parent=1 // pred_check_branch
      %15 = sbr.rel (0) target = $region5
    $region4: #{tpu_custom_call.1} parent=1 // pred_region
      %17 = vsyncadd [#allocation6], 0
      %s19 = sshll.u32 %s0, 4
      %s20 = int_to_ptr.hbm [resolvable:$true] %s19
      %s21 = sshll.u32 [#allocation5], 4
      %s22 = int_to_ptr.vmem [resolvable:$true] %s21
      %24 = dma.hbm_to_vmem [thread:$0]  %s20, 128, %s22, [#allocation6]
    $region5: #{tpu_custom_call.1} parent=1 // pred_fallthru
      _
    // Predicated region
    $region6: #{tpu_custom_call.1} parent=1 // pred_check
      _
    $region7: #{tpu_custom_call.1} parent=1 // pred_check_branch
      %26 = sbr.rel (0) target = $region9
    $region8: #{tpu_custom_call.1} parent=1 // pred_region
      %28 = vsyncadd [#allocation9], 0
      %s29 = sshll.u32 %s1, 4
      %s30 = int_to_ptr.hbm [resolvable:$true] %s29
      %s31 = sshll.u32 [#allocation8], 4
      %s32 = int_to_ptr.vmem [resolvable:$true] %s31
      %37 = dma.hbm_to_vmem [thread:$0]  %s30, 256, %s32, [#allocation9], 64, 64, 4
    $region9: #{tpu_custom_call.1} parent=1 // pred_fallthru
      _
    // Predicated region
    $region10: #{tpu_custom_call.1} parent=1 // pred_check
      _
    $region11: #{tpu_custom_call.1} parent=1 // pred_check_branch
      %39 = sbr.rel (0) target = $region13
    $region12: #{tpu_custom_call.1} parent=1 // pred_region
      %41 = vsyncadd [#allocation9], 0
      %s43 = sshll.u32 %s2, 4
      %s44 = int_to_ptr.hbm [resolvable:$true] %s43
      %s45 = sshll.u32 [#allocation10], 4
      %s46 = int_to_ptr.vmem [resolvable:$true] %s45
      %48 = dma.hbm_to_vmem [thread:$0]  %s44, 32, %s46, [#allocation9]
    $region13: #{tpu_custom_call.1} parent=1 // pred_fallthru
      _
    // Predicated region
    $region14: #{tpu_custom_call.1} parent=1 // pred_check
      _
    $region15: #{tpu_custom_call.1} parent=1 // pred_check_branch
      %50 = sbr.rel (0) target = $region17
    $region16: #{tpu_custom_call.1} parent=1 // pred_region
      %52 = dma.done [#allocation6], 128
    $region17: #{tpu_custom_call.1} parent=1 // pred_fallthru
      _
    // Predicated region
    $region18: #{tpu_custom_call.1} parent=1 // pred_check
      _
    $region19: #{tpu_custom_call.1} parent=1 // pred_check_branch
      %54 = sbr.rel (0) target = $region21
    $region20: #{tpu_custom_call.1} parent=1 // pred_region
      %56 = dma.done [#allocation9], 256
    $region21: #{tpu_custom_call.1} parent=1 // pred_fallthru
      _
    // Predicated region
    $region22: #{tpu_custom_call.1} parent=1 // pred_check
      _
    $region23: #{tpu_custom_call.1} parent=1 // pred_check_branch
      %58 = sbr.rel (0) target = $region25
    $region24: #{tpu_custom_call.1} parent=1 // pred_region
      %60 = dma.done [#allocation9], 32
    $region25: #{tpu_custom_call.1} parent=1 // pred_fallthru
      _
    %p62 = scmp.eq.s32.totalorder 0, 0
    // Predicated region
    $region26: #{tpu_custom_call.1} parent=1 // pred_check
      %p63 = pneg %p62
    $region27: #{tpu_custom_call.1} parent=1 // pred_check_branch
      %65 = sbr.rel (%p63) target = $region29
    $region28: #{tpu_custom_call.1} parent=1 // pred_region
      %v66 = vld [vmem:[#allocation5] sm:$0xff]
      %v67 = vmul.f32 %v66, %v66
      %vm68 = vcmask 261120
      %v69 = vsel %vm68, %v67, 0.0
      %70 = vadd.xlane.f32.xlu0 %v69
      %v71 = vpop.xlane.xlu0 %70
      %v72 = vmax.f32 %v71, 1e-24
      %v73 = vrsqrt.pop %v72
      %v74 = vmul.f32 %v73, %v72
      %v75 = vmul.f32 %v74, %v73
      %v76 = vmul.f32 0.5, %v75
      %v77 = vsub.f32 1.5, %v76
      %v78 = vmul.f32 %v73, %v77
      %vm79 = vweird.f32 %v72
      %vm80 = vweird.f32 %v73
      %vm81 = vmor %vm79, %vm80
      %v82 = vsel %vm81, %v73, %v78
      %v83 = vmul.f32 %v66, %v82
      %v84 = vpack.c.bf16 %v83, %v83
      %vm85 = vcmask 257024
      %86 = vst.msk [vmem:[#allocation2] sm:$0xf] %vm85, %v84
      %vm87 = vcmask 7168
      %88 = vst.msk [vmem:[#allocation3] sm:$0xff] %vm87, 0.0
      %89 = vst.msk [vmem:[#allocation4] sm:$0xff] %vm87, 0.0
    $region29: #{tpu_custom_call.1} parent=1 // pred_fallthru
      _
    %v90 = vld [vmem:[#allocation2] sm:$0xf]
    %v91 = vld [vmem:[#allocation8] sm:$0xf]
    %v92 = vld [vmem:[#allocation8 + $0x4] sm:$0xf]
    %v93 = vld [vmem:[#allocation8 + $0x8] sm:$0xf]
    %v94 = vld [vmem:[#allocation8 + $0xc] sm:$0xf]
    %v99 = vunpack.c.l.b16 %v91
    %v100 = vunpack.c.l.b16 %v92
    %v101 = vunpack.c.l.b16 %v93
    %v102 = vunpack.c.l.b16 %v94
    %v103 = vpack.c.b16 %v100, %v99
    %v104 = vpack.c.b16 %v102, %v101
    %vm107 = vcmask 261120
    %v109 = vsel %vm107, %v90, 0
    %111 = vmatpush.bf16.msra.mxu0 0
    %112 = vmatpush.bf16.msra.mxu0 0
    %113 = vmatpush.bf16.msra.mxu0 0
    %114 = vmatpush.bf16.msra.mxu0 0
    %115 = vmatpush.bf16.msra.mxu0 0
    %116 = vmatpush.bf16.msra.mxu0 0
    %117 = vmatpush.bf16.msra.mxu0 %v104
    %118 = vmatpush.bf16.msra.mxu0 %v103
    %119 = vmatmul.bf16.gmra.mxu0 %v109
    %v120 = vpop.f32.mrf.mxu0
    %v121 = vadd.f32 0.0, %v120
    %v122 = vpop.f32.mrf.mxu0
    %123 = vdwg.mxu0
    %124 = vst [vmem:[#allocation11] sm:$0xff] %v121
    %v125 = vld [vmem:[#allocation10] sm:$0x1]
    %v126 = vld [vmem:[#allocation10 + $0x1] sm:$0x1]
    %v127 = vperm.slane %v125, 0
    %v128 = vadd.f32 %v121, %v127
    %v129 = vmul.f32 %v121, 4.0
    %v130 = vperm.slane %v126, 0
    %v131 = vadd.f32 %v129, %v130
    %v132 = vld [vmem:[#allocation3] sm:$0xff]
    %v133 = vsub.f32 %v128, 1.01
    %v134 = vmul.f32 %v133, 1.442695
    %v135 = vpow.pop %v134
    %136 = vadd.xlane.f32.xlu0 %v135
    %v137 = vpop.xlane.xlu0 %136
    %v138 = vadd.f32 %v132, %v137
    %vm139 = vcmask 7168
    %140 = vst.msk [vmem:[#allocation3] sm:$0xff] %vm139, %v138
    %v141 = vld [vmem:[#allocation4] sm:$0xff]
    %v142 = vsub.f32 %v131, 4.04
    %v143 = vmul.f32 %v142, 1.442695
    %v144 = vpow.pop %v143
    %145 = vadd.xlane.f32.xlu0 %v144
    %v146 = vpop.xlane.xlu0 %145
    %v147 = vadd.f32 %v141, %v146
    %148 = vst.msk [vmem:[#allocation4] sm:$0xff] %vm139, %v147
    // Predicated region
    $region30: #{tpu_custom_call.1} parent=1 // pred_check
      %p149 = pneg %p62
    $region31: #{tpu_custom_call.1} parent=1 // pred_check_branch
      %151 = sbr.rel (%p149) target = $region33
    $region32: #{tpu_custom_call.1} parent=1 // pred_region
      %v152 = vld [vmem:[#allocation3] sm:$0xff]
      %v153 = vlog2.pop %v152
      %v154 = vmul.f32 %v153, 0.6931472
      %v155 = vadd.f32 %v154, 1.01
      %v156 = vld [vmem:[#allocation4] sm:$0xff]
      %v157 = vlog2.pop %v156
      %v158 = vmul.f32 %v157, 0.6931472
      %v159 = vadd.f32 %v158, 4.04
      %v160 = vsub.f32 %v155, 2.7725887
      %v161 = vsub.f32 0.0, %v160
      %162 = vst.msk [vmem:[%s4] sm:$0xff] %vm139, %v161
      %v163 = vsub.f32 %v159, 2.7725887
      %v164 = vsub.f32 0.0, %v163
      %v165 = vmul.f32 %v164, 0.25
      %166 = vst.msk [vmem:[%s5] sm:$0xff] %vm139, %v165
    $region33: #{tpu_custom_call.1} parent=1 // pred_fallthru
      _
    // Predicated region
    $region34: #{tpu_custom_call.1} parent=1 // pred_check
      _
    $region35: #{tpu_custom_call.1} parent=1 // pred_check_branch
      %168 = sbr.rel (0) target = $region37
    $region36: #{tpu_custom_call.1} parent=1 // pred_region
      %170 = vsyncadd [#allocation7], 0
      %s172 = sshll.u32 [#allocation11], 4
      %s173 = int_to_ptr.vmem [resolvable:$true] %s172
      %s174 = sshll.u32 %s3, 4
      %s175 = int_to_ptr.hbm [resolvable:$true] %s174
      %177 = dma.vmem_to_hbm [thread:$0]  %s173, 128, %s175, [#allocation7]
    $region37: #{tpu_custom_call.1} parent=1 // pred_fallthru
      _
    // Predicated region
    $region38: #{tpu_custom_call.1} parent=1 // pred_check
      _
    $region39: #{tpu_custom_call.1} parent=1 // pred_check_branch
      %179 = sbr.rel (0) target = $region41
    $region40: #{tpu_custom_call.1} parent=1 // pred_region
      _
    $region41: #{tpu_custom_call.1} parent=1 // pred_fallthru
      _
    // Predicated region
    $region42: #{tpu_custom_call.1} parent=1 // pred_check
      _
    $region43: #{tpu_custom_call.1} parent=1 // pred_check_branch
      %181 = sbr.rel (0) target = $region45
    $region44: #{tpu_custom_call.1} parent=1 // pred_region
      _
    $region45: #{tpu_custom_call.1} parent=1 // pred_fallthru
      _
    // Predicated region
    $region46: #{tpu_custom_call.1} parent=1 // pred_check
      _
    $region47: #{tpu_custom_call.1} parent=1 // pred_check_branch
      %183 = sbr.rel (0) target = $region49
    $region48: #{tpu_custom_call.1} parent=1 // pred_region
      %185 = dma.done [#allocation7], 128
    $region49: #{tpu_custom_call.1} parent=1 // pred_fallthru
      _
    // Predicated region
    $region50: #{tpu_custom_call.1} parent=1 // pred_check
      _
    $region51: #{tpu_custom_call.1} parent=1 // pred_check_branch
      %187 = sbr.rel (0) target = $region53
    $region52: #{tpu_custom_call.1} parent=1 // pred_region
      _
    $region53: #{tpu_custom_call.1} parent=1 // pred_fallthru
      _
    // Predicated region
    $region54: #{tpu_custom_call.1} parent=1 // pred_check
      _
    $region55: #{tpu_custom_call.1} parent=1 // pred_check_branch
      %189 = sbr.rel (0) target = $region57
    $region56: #{tpu_custom_call.1} parent=1 // pred_region
      _
    $region57: #{tpu_custom_call.1} parent=1 // pred_fallthru
      _
    %190 = vsyncpa [#allocation6], 1
    %191 = vsyncpa [#allocation9], 1
    %192 = vsyncpa [#allocation7], 1

</llo_original>
